<compile_context>
chip_gen: v6e
topology: v6e:2x2x1
jax: 0.10.0
libtpu: 0.0.40
codegen_flags: <defaults>
</compile_context>

<pallas_src>
import jax
import jax.numpy as jnp
from jax.experimental import pallas as pl
from jax.experimental.pallas import tpu as pltpu


_LANES = 128


def _make_all_kernel(m_rows, tm, lanes):
    """Build the reduction kernel; m_rows/tm/lanes are static Python ints."""
    mask_rows = (m_rows % tm) != 0  # last block has rows past the array extent

    def kernel(x_ref, o_ref, acc_ref):
        i = pl.program_id(0)

        @pl.when(i == 0)
        def _():
            acc_ref[...] = jnp.ones_like(acc_ref)

        nz = x_ref[...] != 0                      # VPU compare, any dtype
        if mask_rows:
            # Rows past the array extent contain stale VMEM data -> force truthy.
            row = jax.lax.broadcasted_iota(jnp.int32, (tm, lanes), 0) + i * tm
            nz = jnp.logical_or(nz, row >= m_rows)
        # Elementwise AND into the vector accumulator (VPU only, no XLU, no
        # per-step (1,1) masked store).
        acc_ref[...] = acc_ref[...] * nz.astype(jnp.int32)

        @pl.when(i == pl.num_programs(0) - 1)
        def _():
            # Single cross-lane reduce + single (1,1) store for the whole kernel.
            o_ref[...] = jnp.all(acc_ref[...] != 0).astype(jnp.int32).reshape(1, 1)

    return kernel


def pallas_all(x, *, tm=1024, lanes=_LANES):
    """Equivalent of torch.all(x): returns a scalar jnp.bool_."""
    flat = x.reshape(-1)                      # bitcast, no copy
    total = flat.shape[0]
    if total == 0:
        # torch.all of an empty tensor is True.
        return jnp.bool_(True)

    # Avoid i1 vector loads in Mosaic: treat bools as bytes (cheap, bool tensors only).
    if flat.dtype == jnp.bool_:
        flat = flat.astype(jnp.uint8)

    rem = total % lanes                       # sub-row tail, < 128 elements
    main = total - rem
    tail_ok = jnp.all(flat[main:] != 0) if rem else None
    if main == 0:
        return tail_ok                        # fewer than 128 elements total

    # Common case (rem == 0): pure bitcast reshape, zero HBM copies.
    # Rare case (rem != 0): prefix slice of the bulk + tiny tail reduced above.
    bulk = flat if rem == 0 else flat[:main]
    m_rows = main // lanes
    x2d = bulk.reshape(m_rows, lanes)

    # Big tiles for large inputs; full-extent block for small ones (always legal).
    tm_eff = tm if m_rows >= tm else m_rows
    grid = (pl.cdiv(m_rows, tm_eff),)

    out = pl.pallas_call(
        _make_all_kernel(m_rows, tm_eff, lanes),
        out_shape=jax.ShapeDtypeStruct((1, 1), jnp.int32),
        grid_spec=pltpu.PrefetchScalarGridSpec(
            num_scalar_prefetch=0,
            grid=grid,
            in_specs=[pl.BlockSpec((tm_eff, lanes), lambda i: (i, 0))],
            out_specs=pl.BlockSpec((1, 1), lambda i: (0, 0)),
            scratch_shapes=[pltpu.VMEM((tm_eff, lanes), jnp.int32)],
        ),
        compiler_params=pltpu.CompilerParams(
            dimension_semantics=("arbitrary",),  # output/accumulator resident across grid
        ),
    )(x2d)

    res = out[0, 0] != 0
    if tail_ok is not None:
        res = jnp.logical_and(res, tail_ok)
    return res


if __name__ == "__main__":
    key = jax.random.PRNGKey(0)
    k1, k2, k3, k4 = jax.random.split(key, 4)

    # Primary shape consistent with the test's generic tensor input.
    shape = (2, 4, 16, 16)
    x_mixed = jax.random.randint(k1, shape, 0, 2, dtype=jnp.int32)   # contains zeros -> False
    x_ones = jax.random.randint(k2, shape, 1, 5, dtype=jnp.int32)    # all nonzero -> True

    # Multi-step grid + partial-last-block row masking (2400 rows, 3 x (1024,128) blocks).
    big_shape = (4, 600, 128)
    x_big_true = jax.random.randint(k3, big_shape, 1, 7, dtype=jnp.int32)
    x_big_false = x_big_true.at[1, 2, 3].set(0)

    # Flat size not a multiple of 128 (tail handled outside the kernel) + float dtype.
    x_tail = jax.random.normal(k4, (5, 7, 129), dtype=jnp.float32)

    # Bool dtype and empty input.
    x_bool = x_mixed.astype(jnp.bool_)
    x_empty = jnp.zeros((0, 3), dtype=jnp.float32)

    cases = [x_mixed, x_ones, x_big_true, x_big_false, x_tail, x_bool, x_empty]
    for xc in cases:
        got = jax.block_until_ready(pallas_all(xc))
        want = bool(jnp.all(xc))
        assert bool(got) == want, (xc.shape, str(xc.dtype), bool(got), want)

    print("KERNEL_OK")
</pallas_src>

<mosaic_0001>
module attributes {stable_mosaic.version = 11 : i64} {
  func.func @kernel(%arg0: i32, %arg1: memref<16x128xi32, #tpu.memory_space<vmem>>, %arg2: memref<1x1xi32, #tpu.memory_space<vmem>>, %arg3: memref<16x128xi32, #tpu.memory_space<vmem>>) attributes {dimension_semantics = [#tpu.dimension_semantics<arbitrary>], iteration_bounds = array<i64: 1>, scalar_prefetch = 0 : i64, scratch_operands = 1 : i64, tpu.core_type = #tpu.core_type<tc>, window_params = [{transform_indices = @transform_0, window_bounds = array<i64: 16, 128>}, {pipeline_mode = #tpu.pipeline_mode<synchronous>, transform_indices = @transform_1, window_bounds = array<i64: 1, 1>}]} {
    %c0_i32 = arith.constant 0 : i32
    %0 = arith.cmpi eq, %arg0, %c0_i32 : i32
    %1 = arith.extui %0 : i1 to i32
    %c0_i32_0 = arith.constant 0 : i32
    %2 = arith.cmpi ne, %1, %c0_i32_0 : i32
    scf.if %2 {
      %c1_i32 = arith.constant 1 : i32
      %13 = vector.broadcast %c1_i32 : i32 to vector<16x128xi32>
      %c0_9 = arith.constant 0 : index
      %c0_10 = arith.constant 0 : index
      %14 = vector.load %arg3[%c0_9, %c0_10] : memref<16x128xi32, #tpu.memory_space<vmem>>, vector<16x128xi32>
      tpu.vector_store %arg3[%c0_9, %c0_10], %13 {strides = array<i32>} : memref<16x128xi32, #tpu.memory_space<vmem>>, vector<16x128xi32>,
    } else {
    }
    %c0 = arith.constant 0 : index
    %c0_1 = arith.constant 0 : index
    %3 = vector.load %arg1[%c0, %c0_1] : memref<16x128xi32, #tpu.memory_space<vmem>>, vector<16x128xi32>
    %c0_i32_2 = arith.constant 0 : i32
    %4 = vector.broadcast %c0_i32_2 : i32 to vector<16x128xi32>
    %5 = arith.cmpi ne, %3, %4 : vector<16x128xi32>
    %c0_3 = arith.constant 0 : index
    %c0_4 = arith.constant 0 : index
    %6 = vector.load %arg3[%c0_3, %c0_4] : memref<16x128xi32, #tpu.memory_space<vmem>>, vector<16x128xi32>
    %7 = arith.extui %5 : vector<16x128xi1> to vector<16x128xi32>
    %8 = arith.muli %6, %7 : vector<16x128xi32>
    %c0_5 = arith.constant 0 : index
    %c0_6 = arith.constant 0 : index
    %9 = vector.load %arg3[%c0_5, %c0_6] : memref<16x128xi32, #tpu.memory_space<vmem>>, vector<16x128xi32>
    tpu.vector_store %arg3[%c0_5, %c0_6], %8 {strides = array<i32>} : memref<16x128xi32, #tpu.memory_space<vmem>>, vector<16x128xi32>,
    %c0_i32_7 = arith.constant 0 : i32
    %10 = arith.cmpi eq, %arg0, %c0_i32_7 : i32
    %11 = arith.extui %10 : i1 to i32
    %c0_i32_8 = arith.constant 0 : i32
    %12 = arith.cmpi ne, %11, %c0_i32_8 : i32
    scf.if %12 {
      %c0_9 = arith.constant 0 : index
      %c0_10 = arith.constant 0 : index
      %13 = vector.load %arg3[%c0_9, %c0_10] : memref<16x128xi32, #tpu.memory_space<vmem>>, vector<16x128xi32>
      %c0_i32_11 = arith.constant 0 : i32
      %14 = vector.broadcast %c0_i32_11 : i32 to vector<16x128xi32>
      %15 = arith.cmpi ne, %13, %14 : vector<16x128xi32>
      %cst = arith.constant 1.000000e+00 : f32
      %cst_12 = arith.constant 0.000000e+00 : f32
      %16 = vector.broadcast %cst : f32 to vector<16x128xf32>
      %17 = vector.broadcast %cst_12 : f32 to vector<16x128xf32>
      %18 = arith.select %15, %16, %17 : vector<16x128xi1>, vector<16x128xf32>
      %19 = vector.shape_cast %18 : vector<16x128xf32> to vector<1x16x128xf32>
      %cst_13 = arith.constant dense<0x7F800000> : vector<1xf32>
      %20 = vector.multi_reduction <minimumf>, %19, %cst_13 [1, 2] : vector<1x16x128xf32> to vector<1xf32>
      %21 = vector.shape_cast %20 : vector<1xf32> to vector<1x1x1xf32>
      %22 = vector.extract %21[0, 0, 0] : f32 from vector<1x1x1xf32>
      %cst_14 = arith.constant 0.000000e+00 : f32
      %23 = arith.cmpf ogt, %22, %cst_14 : f32
      %24 = arith.extui %23 : i1 to i32
      %25 = vector.broadcast %24 : i32 to vector<1x1xi32>
      %c0_15 = arith.constant 0 : index
      %c0_16 = arith.constant 0 : index
      %26 = vector.load %arg2[%c0_15, %c0_16] : memref<1x1xi32, #tpu.memory_space<vmem>>, vector<1x1xi32>
      tpu.vector_store %arg2[%c0_15, %c0_16], %25 {strides = array<i32>} : memref<1x1xi32, #tpu.memory_space<vmem>>, vector<1x1xi32>,
    } else {
    }
    return
  }
  func.func @transform_0(%arg0: i32) -> (i32, i32) {
    %c0_i32 = arith.constant 0 : i32
    %c0_i32_0 = arith.constant 0 : i32
    return %arg0, %c0_i32 : i32, i32
  }
  func.func @transform_1(%arg0: i32) -> (i32, i32) {
    %c0_i32 = arith.constant 0 : i32
    %c0_i32_0 = arith.constant 0 : i32
    %c0_i32_1 = arith.constant 0 : i32
    return %c0_i32, %c0_i32_0 : i32, i32
  }
}

</mosaic_0001>

<llo_original>
// kernel: tpu_custom_call.1
$region0: #{tpu_custom_call.1}
  #allocation0 [shape = 'u32[]', space=smem, size = 0x4, offset = 0x4, fixed_abs, tag = 'smem constant byte address 0x4 - core index']
  #allocation1 [shape = 'u32[144,128]{1,0:T(1,128)}', space=vmem, size = 0x12000, scoped, tag = 'internal scratch']
  #allocation2 [shape = 's32[16,128]{1,0:T(8,128)}', space=vmem, size = 0x2000, scoped, tag = 'scratch operand']
  %s0 = inlined_call_operand.hbm [shape: s32[16,128], index: 0, kind: input, shape index: {}]
  %s1 = inlined_call_operand.hbm [shape: s32[1,1], index: 1, kind: output, shape index: {}]
  %s2 = sld [smem:[#allocation0]]
  $region26: #{tpu_custom_call.1} parent=0
    _
  %s4 = ssub.s32 1, %s2
  %s5 = scalar_select 0, %s4, %s2
  $region1: #{tpu_custom_call.1} parent=0
    #allocation3 [shape = 'u8[8192]{0}', space=vmem, size = 0x2000, scoped, tag = 'input window, operand 0, single buffered']
    #allocation4 [shape = 's32[1]{0}', space=sflag, size = 0x4, scoped, tag = 'scoped memory for tpu_custom_call.1']
    #allocation5 [shape = 's32[1]{0}', space=sflag, size = 0x4, scoped, tag = 'scoped memory for tpu_custom_call.1']
    #allocation6 [shape = 'u8[512]{0}', space=vmem, size = 0x400, scoped, tag = 'output window, operand 0, single buffered']
    %6 = vsyncpa [#allocation4], 0
    %7 = vsyncpa [#allocation5], 0
    // Predicated region
    $region2: #{tpu_custom_call.1} parent=1 // pred_check
      _
    $region3: #{tpu_custom_call.1} parent=1 // pred_check_branch
      %9 = sbr.rel (0) target = $region5
    $region4: #{tpu_custom_call.1} parent=1 // pred_region
      %s11 = ssub.s32 256, 256
      %12 = vsyncadd [#allocation4], %s11
      %s13 = sshll.u32 [#allocation3], 4
      %s14 = int_to_ptr.vmem [resolvable:$true] %s13
      %19 = dma.hbm_to_vmem [thread:$0]  %s0, 256, %s14, [#allocation4], 128, 128, 8
    $region5: #{tpu_custom_call.1} parent=1 // pred_fallthru
      _
    // Predicated region
    $region6: #{tpu_custom_call.1} parent=1 // pred_check
      _
    $region7: #{tpu_custom_call.1} parent=1 // pred_check_branch
      %21 = sbr.rel (0) target = $region9
    $region8: #{tpu_custom_call.1} parent=1 // pred_region
      %22 = dma.done [#allocation4], 256
    $region9: #{tpu_custom_call.1} parent=1 // pred_fallthru
      _
    %p23 = scmp.eq.s32.totalorder 0, 0
    // Predicated region
    $region10: #{tpu_custom_call.1} parent=1 // pred_check
      %p24 = pneg %p23
    $region11: #{tpu_custom_call.1} parent=1 // pred_check_branch
      %26 = sbr.rel (%p24) target = $region13
    $region12: #{tpu_custom_call.1} parent=1 // pred_region
      %27 = vst [vmem:[#allocation2] sm:$0xff] 1
      %28 = vst [vmem:[#allocation2 + $0x8] sm:$0xff] 1
    $region13: #{tpu_custom_call.1} parent=1 // pred_fallthru
      _
    %v29 = vld [vmem:[#allocation3] sm:$0xff]
    %v30 = vld [vmem:[#allocation3 + $0x8] sm:$0xff]
    %vm31 = vcmp.ne.s32.totalorder %v29, 0
    %vm32 = vcmp.ne.s32.totalorder %v30, 0
    %v33 = vld [vmem:[#allocation2] sm:$0xff]
    %v34 = vld [vmem:[#allocation2 + $0x8] sm:$0xff]
    %v35 = vsel %vm31, 1, 0
    %v36 = vsel %vm32, 1, 0
    %v37 = vmul.u32 %v33, %v35
    %v38 = vmul.u32 %v34, %v36
    %39 = vst [vmem:[#allocation2] sm:$0xff] %v37
    %40 = vst [vmem:[#allocation2 + $0x8] sm:$0xff] %v38
    // Predicated region
    $region14: #{tpu_custom_call.1} parent=1 // pred_check
      %p41 = pneg %p23
    $region15: #{tpu_custom_call.1} parent=1 // pred_check_branch
      %43 = sbr.rel (%p41) target = $region17
    $region16: #{tpu_custom_call.1} parent=1 // pred_region
      %v44 = vld [vmem:[#allocation2] sm:$0xff]
      %v45 = vld [vmem:[#allocation2 + $0x8] sm:$0xff]
      %vm46 = vcmp.ne.s32.totalorder %v44, 0
      %vm47 = vcmp.ne.s32.totalorder %v45, 0
      %v48 = vsel %vm46, 1.0, 0.0
      %v49 = vsel %vm47, 1.0, 0.0
      %v50 = vmin.f32 %v48, %v49
      %51 = vmin.xlane.f32.xlu0 %v50
      %v52 = vpop.xlane.xlu0 %51
      %v53 = vrot.slane %v52, 4
      %v54 = vmin.f32 %v52, %v53
      %v55 = vrot.slane %v54, 2
      %v56 = vmin.f32 %v54, %v55
      %v57 = vrot.slane %v56, 1
      %v58 = vmin.f32 %v56, %v57
      %s59 = vtos %v58
      %p60 = scmp.gt.f32.partialorder %s59, 0.0
      %s61 = scalar_select %p60, 1, 0
      %v62 = vstv %s61
      %vm63 = vcmask 0
      %64 = vst.msk [vmem:[#allocation6] sm:$0x1] %vm63, %v62
    $region17: #{tpu_custom_call.1} parent=1 // pred_fallthru
      _
    // Predicated region
    $region18: #{tpu_custom_call.1} parent=1 // pred_check
      _
    $region19: #{tpu_custom_call.1} parent=1 // pred_check_branch
      %66 = sbr.rel (0) target = $region21
    $region20: #{tpu_custom_call.1} parent=1 // pred_region
      %s68 = ssub.s32 16, 16
      %69 = vsyncadd [#allocation5], %s68
      %s71 = sshll.u32 [#allocation6], 4
      %s72 = int_to_ptr.vmem [resolvable:$true] %s71
      %74 = dma.vmem_to_hbm [thread:$0]  %s72, 16, %s1, [#allocation5]
    $region21: #{tpu_custom_call.1} parent=1 // pred_fallthru
      _
    // Predicated region
    $region22: #{tpu_custom_call.1} parent=1 // pred_check
      _
    $region23: #{tpu_custom_call.1} parent=1 // pred_check_branch
      %76 = sbr.rel (0) target = $region25
    $region24: #{tpu_custom_call.1} parent=1 // pred_region
      %77 = dma.done [#allocation5], 16
    $region25: #{tpu_custom_call.1} parent=1 // pred_fallthru
      _
    %78 = vsyncpa [#allocation4], 1
    %79 = vsyncpa [#allocation5], 1

</llo_original>
